<compile_context>
chip_gen: v5e
topology: v5e:2x2
jax: 0.10.0
libtpu: 0.0.40
codegen_flags: <defaults>
</compile_context>

<pallas_src>
import jax
import jax.numpy as jnp
from jax.experimental import pallas as pl

# ---- sizes (small, consistent with the forward's shape contract) -------------
B, T, F = 2, 8, 32        # batch, frames, per-frame input feature width for modelA
D = 32                    # modelA (wav2vec2-like) encoder width -> x1 is (B, T, D)
H = 16                    # modelB (DDSP-like) decoder hidden width
NH = 8                    # number of harmonics (amplitude / harmonic head width)
WHEADS = NH + 1 + NH      # fused head width: amplitude | total_amp | harmonic
WOUT = D + NH + 1 + 1 + NH    # concat width: x1 | amplitude | total_amp | pitch | harmonic
OUT_PAD = 128             # lane-dense padded output width (sliced off in wrapper)

# NOTE: the PyTorch code computes
#   trimmed_len = min(x1.size(1), amplitude_return[1].size(1))
# i.e. it literally compares x1's time dim against amplitude_return's *channel*
# dim (after indexing batch element 1).  We reproduce that literally; shapes are
# chosen (T == NH) so the literal and the obviously-intended semantics coincide.
TRIM = min(T, NH)
# Guard (review): the kernel bakes TRIM statically; it must equal T so the
# flattened (B*T, ·) layout and the reference's runtime trim agree.
assert TRIM == T, (TRIM, T)

# ---- parameter-slab row layout (all params packed into one (64, 128) array) --
ROW_WA = 0            # rows 0..F-1 , cols 0:D       : modelA weight (F, D)
ROW_BA = F            # row  32     , cols 0:D       : modelA bias (D,)
ROW_W1P = F + 1       # row  33     , cols 0:H       : trunk weight row for pitch
ROW_W1L = F + 2       # row  34     , cols 0:H       : trunk weight row for loudness
ROW_B1 = F + 3        # row  35     , cols 0:H       : trunk bias
ROW_WH = 40           # rows 40..55 , cols 0:WHEADS  : fused head weight (H, 17)
ROW_BH = ROW_WH + H   # row  56     , cols 0:WHEADS  : fused head bias
ROWS = 64             # padded slab height (multiple of 8 sublanes)


def _combine_kernel(x_ref, p_ref, l_ref, w_ref, o_ref):
    x = x_ref[...]            # (B*T, F)
    p = p_ref[...]            # (B*T, 1) pitch frames
    l = l_ref[...]            # (B*T, 1) loudness frames

    # --- modelA(x, mask=False, features_only=True)['x'] (wav2vec2 stand-in) ---
    wa = w_ref[ROW_WA:ROW_WA + F, 0:D]                      # (F, D)
    ba = w_ref[ROW_BA:ROW_BA + 1, 0:D]                      # (1, D)
    x1 = jnp.tanh(jnp.dot(x, wa, preferred_element_type=jnp.float32) + ba)

    # --- modelB trunk: K=2 contraction done as VPU FMAs (no MXU, no concat) ---
    w1p = w_ref[ROW_W1P:ROW_W1P + 1, 0:H]                   # (1, H)
    w1l = w_ref[ROW_W1L:ROW_W1L + 1, 0:H]                   # (1, H)
    b1 = w_ref[ROW_B1:ROW_B1 + 1, 0:H]                      # (1, H)
    hid = jnp.tanh(p * w1p + l * w1l + b1)                  # (B*T, H)

    # --- fused sigmoid heads: [amplitude | total_amp | harmonic] in one matmul -
    wh = w_ref[ROW_WH:ROW_WH + H, 0:WHEADS]                 # (H, 17)
    bh = w_ref[ROW_BH:ROW_BH + 1, 0:WHEADS]                 # (1, 17)
    heads = jax.nn.sigmoid(
        jnp.dot(hid, wh, preferred_element_type=jnp.float32) + bh)   # (B*T, 17)

    # --- CombineModel: build one lane-dense 128-wide row slab, single store ---
    # columns: x1 | amplitude | total_amp | pitch | harmonic | zero pad
    pad = jnp.zeros((x.shape[0], OUT_PAD - WOUT), jnp.float32)
    o_ref[...] = jnp.concatenate(
        [x1, heads[:, :NH + 1], p, heads[:, NH + 1:], pad], axis=-1)


def make_params():
    ks = jax.random.split(jax.random.PRNGKey(0), 10)
    s = 0.1
    return dict(
        wa=s * jax.random.normal(ks[0], (F, D), jnp.float32),
        ba=s * jax.random.normal(ks[1], (1, D), jnp.float32),
        w1=s * jax.random.normal(ks[2], (2, H), jnp.float32),
        b1=s * jax.random.normal(ks[3], (1, H), jnp.float32),
        wamp=s * jax.random.normal(ks[4], (H, NH), jnp.float32),
        bamp=s * jax.random.normal(ks[5], (1, NH), jnp.float32),
        wta=s * jax.random.normal(ks[6], (H, 1), jnp.float32),
        bta=s * jax.random.normal(ks[7], (1, 1), jnp.float32),
        wh=s * jax.random.normal(ks[8], (H, NH), jnp.float32),
        bh=s * jax.random.normal(ks[9], (1, NH), jnp.float32),
    )


def pack_params(params):
    """Pack all weights/biases into a single (ROWS, 128) f32 slab (one DMA stream)."""
    slab = jnp.zeros((ROWS, OUT_PAD), jnp.float32)
    slab = slab.at[ROW_WA:ROW_WA + F, 0:D].set(params["wa"])
    slab = slab.at[ROW_BA, 0:D].set(params["ba"][0])
    slab = slab.at[ROW_W1P, 0:H].set(params["w1"][0])
    slab = slab.at[ROW_W1L, 0:H].set(params["w1"][1])
    slab = slab.at[ROW_B1, 0:H].set(params["b1"][0])
    w_heads = jnp.concatenate([params["wamp"], params["wta"], params["wh"]], axis=1)
    b_heads = jnp.concatenate([params["bamp"], params["bta"], params["bh"]], axis=1)
    slab = slab.at[ROW_WH:ROW_WH + H, 0:WHEADS].set(w_heads)
    slab = slab.at[ROW_BH, 0:WHEADS].set(b_heads[0])
    return slab


def combine_model(x, pitch, loudness, params):
    """x: (B, T, F), pitch: (B, T, 1), loudness: (B, T, 1) -> (B, TRIM, WOUT)."""
    Bx, Tx, Fx = x.shape
    x2 = x.reshape(Bx * Tx, Fx)
    p2 = pitch.reshape(Bx * Tx, 1)
    l2 = loudness.reshape(Bx * Tx, 1)
    slab = pack_params(params)
    # Grid-less call: whole problem in one block, full arrays resident in VMEM.
    out = pl.pallas_call(
        _combine_kernel,
        out_shape=jax.ShapeDtypeStruct((Bx * Tx, OUT_PAD), jnp.float32),
    )(x2, p2, l2, slab)
    return out.reshape(Bx, Tx, OUT_PAD)[:, :TRIM, :WOUT]


def combine_model_ref(x, pitch, loudness, params):
    x1 = jnp.tanh(x @ params["wa"] + params["ba"])
    # K=2 trunk written as explicit FMAs (algebraically identical to
    # concat([pitch, loudness]) @ w1).
    hid = jnp.tanh(pitch * params["w1"][0] + loudness * params["w1"][1] + params["b1"])
    amplitude = jax.nn.sigmoid(hid @ params["wamp"] + params["bamp"])
    total_amp = jax.nn.sigmoid(hid @ params["wta"] + params["bta"])
    harmonic = jax.nn.sigmoid(hid @ params["wh"] + params["bh"])
    pitch_ret = pitch
    trim = min(x1.shape[1], amplitude[1].shape[1])   # literal PyTorch semantics
    out = jnp.concatenate(
        [x1[:, :trim], amplitude[:, :trim], total_amp[:, :trim],
         pitch_ret[:, :trim], harmonic[:, :trim]], axis=-1)
    return out


if __name__ == "__main__":
    key = jax.random.PRNGKey(0)
    kx, kp, kl = jax.random.split(key, 3)
    x = jax.random.normal(kx, (B, T, F), jnp.float32)
    pitch = jax.random.uniform(kp, (B, T, 1), jnp.float32, 0.0, 1.0)
    loudness = jax.random.uniform(kl, (B, T, 1), jnp.float32, -1.0, 0.0)
    params = make_params()

    out = jax.block_until_ready(combine_model(x, pitch, loudness, params))
    ref = combine_model_ref(x, pitch, loudness, params)

    assert out.shape == (B, TRIM, WOUT), out.shape
    assert jnp.allclose(out, ref, atol=1e-5, rtol=1e-5)
    print("KERNEL_OK")
</pallas_src>

<mosaic_0001>
module attributes {stable_mosaic.version = 11 : i64} {
  func.func @_combine_kernel(%arg0: memref<16x32xf32, #tpu.memory_space<vmem>>, %arg1: memref<16x1xf32, #tpu.memory_space<vmem>>, %arg2: memref<16x1xf32, #tpu.memory_space<vmem>>, %arg3: memref<64x128xf32, #tpu.memory_space<vmem>>, %arg4: memref<16x128xf32, #tpu.memory_space<vmem>>) attributes {dimension_semantics = [], scalar_prefetch = 0 : i64, scratch_operands = 0 : i64, tpu.core_type = #tpu.core_type<tc>} {
    %c0 = arith.constant 0 : index
    %c0_0 = arith.constant 0 : index
    %0 = vector.load %arg0[%c0, %c0_0] : memref<16x32xf32, #tpu.memory_space<vmem>>, vector<16x32xf32>
    %c0_1 = arith.constant 0 : index
    %c0_2 = arith.constant 0 : index
    %1 = vector.load %arg1[%c0_1, %c0_2] : memref<16x1xf32, #tpu.memory_space<vmem>>, vector<16x1xf32>
    %c0_3 = arith.constant 0 : index
    %c0_4 = arith.constant 0 : index
    %2 = vector.load %arg2[%c0_3, %c0_4] : memref<16x1xf32, #tpu.memory_space<vmem>>, vector<16x1xf32>
    %c0_5 = arith.constant 0 : index
    %c0_6 = arith.constant 0 : index
    %3 = vector.load %arg3[%c0_5, %c0_6] : memref<64x128xf32, #tpu.memory_space<vmem>>, vector<32x32xf32>
    %c32 = arith.constant 32 : index
    %c0_7 = arith.constant 0 : index
    %4 = vector.load %arg3[%c32, %c0_7] : memref<64x128xf32, #tpu.memory_space<vmem>>, vector<1x32xf32>
    %cst = arith.constant dense<0.000000e+00> : vector<16x32xf32>
    %5 = tpu.matmul %0, %3, %cst {dimension_numbers = #tpu.dot_dimension_numbers<[1], [0], [0], [1], [0, 0, 1, 1], [], []>} : vector<16x32xf32>, vector<32x32xf32>, vector<16x32xf32> -> vector<16x32xf32>
    %6 = vector.broadcast %4 : vector<1x32xf32> to vector<16x32xf32>
    %7 = arith.addf %5, %6 : vector<16x32xf32>
    %8 = math.tanh %7 : vector<16x32xf32>
    %c33 = arith.constant 33 : index
    %c0_8 = arith.constant 0 : index
    %9 = vector.load %arg3[%c33, %c0_8] : memref<64x128xf32, #tpu.memory_space<vmem>>, vector<1x16xf32>
    %c34 = arith.constant 34 : index
    %c0_9 = arith.constant 0 : index
    %10 = vector.load %arg3[%c34, %c0_9] : memref<64x128xf32, #tpu.memory_space<vmem>>, vector<1x16xf32>
    %c35 = arith.constant 35 : index
    %c0_10 = arith.constant 0 : index
    %11 = vector.load %arg3[%c35, %c0_10] : memref<64x128xf32, #tpu.memory_space<vmem>>, vector<1x16xf32>
    %12 = vector.broadcast %1 : vector<16x1xf32> to vector<16x16xf32>
    %13 = vector.broadcast %9 : vector<1x16xf32> to vector<16x16xf32>
    %14 = arith.mulf %12, %13 : vector<16x16xf32>
    %15 = vector.broadcast %2 : vector<16x1xf32> to vector<16x16xf32>
    %16 = vector.broadcast %10 : vector<1x16xf32> to vector<16x16xf32>
    %17 = arith.mulf %15, %16 : vector<16x16xf32>
    %18 = arith.addf %14, %17 : vector<16x16xf32>
    %19 = vector.broadcast %11 : vector<1x16xf32> to vector<16x16xf32>
    %20 = arith.addf %18, %19 : vector<16x16xf32>
    %21 = math.tanh %20 : vector<16x16xf32>
    %c40 = arith.constant 40 : index
    %c0_11 = arith.constant 0 : index
    %22 = vector.load %arg3[%c40, %c0_11] : memref<64x128xf32, #tpu.memory_space<vmem>>, vector<16x17xf32>
    %c56 = arith.constant 56 : index
    %c0_12 = arith.constant 0 : index
    %23 = vector.load %arg3[%c56, %c0_12] : memref<64x128xf32, #tpu.memory_space<vmem>>, vector<1x17xf32>
    %cst_13 = arith.constant dense<0.000000e+00> : vector<16x17xf32>
    %24 = tpu.matmul %21, %22, %cst_13 {dimension_numbers = #tpu.dot_dimension_numbers<[1], [0], [0], [1], [0, 0, 1, 1], [], []>} : vector<16x16xf32>, vector<16x17xf32>, vector<16x17xf32> -> vector<16x17xf32>
    %25 = vector.broadcast %23 : vector<1x17xf32> to vector<16x17xf32>
    %26 = arith.addf %24, %25 : vector<16x17xf32>
    %27 = arith.negf %26 : vector<16x17xf32>
    %28 = math.exp %27 : vector<16x17xf32>
    %cst_14 = arith.constant 1.000000e+00 : f32
    %29 = vector.broadcast %cst_14 : f32 to vector<16x17xf32>
    %30 = arith.addf %29, %28 : vector<16x17xf32>
    %31 = arith.divf %29, %30 : vector<16x17xf32>
    %cst_15 = arith.constant 0.000000e+00 : f32
    %32 = vector.broadcast %cst_15 : f32 to vector<16x78xf32>
    %33 = vector.extract_strided_slice %31 {offsets = [0, 0], sizes = [16, 9], strides = [1, 1]} : vector<16x17xf32> to vector<16x9xf32>
    %34 = vector.extract_strided_slice %31 {offsets = [0, 9], sizes = [16, 8], strides = [1, 1]} : vector<16x17xf32> to vector<16x8xf32>
    %35 = tpu.concatenate %8, %33, %1, %34, %32 in 1 : vector<16x32xf32>, vector<16x9xf32>, vector<16x1xf32>, vector<16x8xf32>, vector<16x78xf32> -> vector<16x128xf32>
    %c0_16 = arith.constant 0 : index
    %c0_17 = arith.constant 0 : index
    %36 = vector.load %arg4[%c0_16, %c0_17] : memref<16x128xf32, #tpu.memory_space<vmem>>, vector<16x128xf32>
    tpu.vector_store %arg4[%c0_16, %c0_17], %35 {strides = array<i32>} : memref<16x128xf32, #tpu.memory_space<vmem>>, vector<16x128xf32>,
    return
  }
}

</mosaic_0001>

<llo_original>
// kernel: tpu_custom_call.1
$region0: #{tpu_custom_call.1}
  #allocation0 [shape = 'u32[]', space=smem, size = 0x4, offset = 0x4, fixed_abs, tag = 'smem constant byte address 0x4 - core index']
  #allocation1 [shape = 'u32[72,128]{1,0:T(1,128)}', space=vmem, size = 0x9000, scoped, tag = 'internal scratch']
  %s0 = inlined_call_operand.vmem [shape: f32[16,32], index: 0, kind: input, shape index: {}]
  %s1 = inlined_call_operand.vmem [shape: f32[16,1], index: 1, kind: input, shape index: {}]
  %s2 = inlined_call_operand.vmem [shape: f32[16,1], index: 2, kind: input, shape index: {}]
  %s3 = inlined_call_operand.hbm [shape: f32[64,128], index: 3, kind: input, shape index: {}]
  %s4 = inlined_call_operand.hbm [shape: f32[16,128], index: 4, kind: output, shape index: {}]
  %s5 = sld [smem:[#allocation0]]
  $region30: #{tpu_custom_call.1} parent=0
    _
  %s7 = ssub.s32 1, %s5
  %s8 = scalar_select 0, %s7, %s5
  $region1: #{tpu_custom_call.1} parent=0
    #allocation2 [shape = 'u8[32768]{0}', space=vmem, size = 0x8000, scoped, tag = 'input window, operand 3, single buffered']
    #allocation3 [shape = 's32[1]{0}', space=sflag, size = 0x4, scoped, tag = 'scoped memory for tpu_custom_call.1']
    #allocation4 [shape = 's32[1]{0}', space=sflag, size = 0x4, scoped, tag = 'scoped memory for tpu_custom_call.1']
    #allocation5 [shape = 'u8[8192]{0}', space=vmem, size = 0x2000, scoped, tag = 'output window, operand 0, single buffered']
    %9 = vsyncpa [#allocation3], 0
    %10 = vsyncpa [#allocation4], 0
    // Predicated region
    $region2: #{tpu_custom_call.1} parent=1 // pred_check
      _
    $region3: #{tpu_custom_call.1} parent=1 // pred_check_branch
      %12 = sbr.rel (0) target = $region5
    $region4: #{tpu_custom_call.1} parent=1 // pred_region
      _
    $region5: #{tpu_custom_call.1} parent=1 // pred_fallthru
      _
    // Predicated region
    $region6: #{tpu_custom_call.1} parent=1 // pred_check
      _
    $region7: #{tpu_custom_call.1} parent=1 // pred_check_branch
      %14 = sbr.rel (0) target = $region9
    $region8: #{tpu_custom_call.1} parent=1 // pred_region
      _
    $region9: #{tpu_custom_call.1} parent=1 // pred_fallthru
      _
    // Predicated region
    $region10: #{tpu_custom_call.1} parent=1 // pred_check
      _
    $region11: #{tpu_custom_call.1} parent=1 // pred_check_branch
      %16 = sbr.rel (0) target = $region13
    $region12: #{tpu_custom_call.1} parent=1 // pred_region
      _
    $region13: #{tpu_custom_call.1} parent=1 // pred_fallthru
      _
    // Predicated region
    $region14: #{tpu_custom_call.1} parent=1 // pred_check
      _
    $region15: #{tpu_custom_call.1} parent=1 // pred_check_branch
      %18 = sbr.rel (0) target = $region17
    $region16: #{tpu_custom_call.1} parent=1 // pred_region
      %20 = vsyncadd [#allocation3], 0
      %s21 = sshll.u32 %s3, 4
      %s22 = int_to_ptr.hbm [resolvable:$true] %s21
      %s23 = sshll.u32 [#allocation2], 4
      %s24 = int_to_ptr.vmem [resolvable:$true] %s23
      %29 = dma.hbm_to_vmem [thread:$0]  %s22, 1024, %s24, [#allocation3], 128, 128, 8
    $region17: #{tpu_custom_call.1} parent=1 // pred_fallthru
      _
    // Predicated region
    $region18: #{tpu_custom_call.1} parent=1 // pred_check
      _
    $region19: #{tpu_custom_call.1} parent=1 // pred_check_branch
      %31 = sbr.rel (0) target = $region21
    $region20: #{tpu_custom_call.1} parent=1 // pred_region
      %33 = dma.done [#allocation3], 1024
    $region21: #{tpu_custom_call.1} parent=1 // pred_fallthru
      _
    %v34 = vld [vmem:[%s0] sm:$0xff]
    %v35 = vld [vmem:[%s0 + $0x8] sm:$0xff]
    %v36 = vld [vmem:[%s1] sm:$0xff]
    %v37 = vld [vmem:[%s1 + $0x8] sm:$0xff]
    %v38 = vld [vmem:[%s2] sm:$0xff]
    %v39 = vld [vmem:[%s2 + $0x8] sm:$0xff]
    %v40 = vld [vmem:[#allocation2] sm:$0xff]
    %v41 = vld [vmem:[#allocation2 + $0x8] sm:$0xff]
    %v42 = vld [vmem:[#allocation2 + $0x10] sm:$0xff]
    %v43 = vld [vmem:[#allocation2 + $0x18] sm:$0xff]
    %v44 = vld [vmem:[#allocation2 + $0x20] sm:$0x1]
    %v45 = vperm.slane %v44, 0
    %vm46 = vcmask 261120
    %v48 = vsel %vm46, %v34, 0
    %v51 = vsel %vm46, %v35, 0
    %53 = vmatpush.msra.mxu0 0.0
    %54 = vmatpush.msra.mxu0 0.0
    %55 = vmatpush.msra.mxu0 0.0
    %56 = vmatpush.msra.mxu0 0.0
    %57 = vmatpush.msra.mxu0 0.0
    %58 = vmatpush.msra.mxu0 0.0
    %59 = vmatpush.msra.mxu0 0.0
    %60 = vmatpush.msra.mxu0 0.0
    %61 = vmatpush.msra.mxu0 0.0
    %62 = vmatpush.msra.mxu0 0.0
    %63 = vmatpush.msra.mxu0 0.0
    %64 = vmatpush.msra.mxu0 0.0
    %65 = vmatpush.msra.mxu0 %v43
    %66 = vmatpush.msra.mxu0 %v42
    %67 = vmatpush.msra.mxu0 %v41
    %68 = vmatpush.msra.mxu0 %v40
    %69 = vmatmul.f32.gmra.mxu0 %v48
    %v70 = vpop.f32.mrf.mxu0
    %v71 = vadd.f32 %v45, %v70
    %72 = vmatmul.f32.gmra.mxu0 %v51
    %v73 = vpop.f32.mrf.mxu0
    %v74 = vadd.f32 %v45, %v73
    %75 = vdwg.mxu0
    %v76 = vtanh.pop %v71
    %v77 = vtanh.pop %v74
    %v78 = vld [vmem:[#allocation2 + $0x21] sm:$0x1]
    %v79 = vld [vmem:[#allocation2 + $0x22] sm:$0x1]
    %v80 = vld [vmem:[#allocation2 + $0x23] sm:$0x1]
    %82 = vset.pattern.permute.xlu0 0
    %83 = vperm.xlu0 %82, %v36
    %v84 = vpop.permute.xlu0 %83
    %87 = vset.pattern.permute.xlu0 0
    %88 = vperm.xlu0 %87, %v37
    %v89 = vpop.permute.xlu0 %88
    %v91 = vperm.slane %v78, 0
    %v92 = vmul.f32 %v84, %v91
    %v93 = vmul.f32 %v89, %v91
    %95 = vset.pattern.permute.xlu0 0
    %96 = vperm.xlu0 %95, %v38
    %v97 = vpop.permute.xlu0 %96
    %100 = vset.pattern.permute.xlu0 0
    %101 = vperm.xlu0 %100, %v39
    %v102 = vpop.permute.xlu0 %101
    %v104 = vperm.slane %v79, 0
    %v105 = vmul.f32 %v97, %v104
    %v106 = vmul.f32 %v102, %v104
    %v107 = vadd.f32 %v92, %v105
    %v108 = vadd.f32 %v93, %v106
    %v109 = vperm.slane %v80, 0
    %v110 = vadd.f32 %v107, %v109
    %v111 = vadd.f32 %v108, %v109
    %v112 = vtanh.pop %v110
    %v113 = vtanh.pop %v111
    %v114 = vld [vmem:[#allocation2 + $0x28] sm:$0xff]
    %v115 = vld [vmem:[#allocation2 + $0x30] sm:$0xff]
    %v116 = vld [vmem:[#allocation2 + $0x38] sm:$0x1]
    %v117 = vperm.slane %v116, 0
    %vm118 = vcmask 130048
    %v120 = vsel %vm118, %v112, 0
    %v123 = vsel %vm118, %v113, 0
    %125 = vmatpush.msra.mxu0 0.0
    %126 = vmatpush.msra.mxu0 0.0
    %127 = vmatpush.msra.mxu0 0.0
    %128 = vmatpush.msra.mxu0 0.0
    %129 = vmatpush.msra.mxu0 0.0
    %130 = vmatpush.msra.mxu0 0.0
    %131 = vmatpush.msra.mxu0 0.0
    %132 = vmatpush.msra.mxu0 0.0
    %133 = vmatpush.msra.mxu0 0.0
    %134 = vmatpush.msra.mxu0 0.0
    %135 = vmatpush.msra.mxu0 0.0
    %136 = vmatpush.msra.mxu0 0.0
    %137 = vmatpush.msra.mxu0 0.0
    %138 = vmatpush.msra.mxu0 0.0
    %139 = vmatpush.msra.mxu0 %v115
    %140 = vmatpush.msra.mxu0 %v114
    %141 = vmatmul.f32.gmra.mxu0 %v120
    %v142 = vpop.f32.mrf.mxu0
    %v143 = vadd.f32 %v117, %v142
    %144 = vmatmul.f32.gmra.mxu0 %v123
    %v145 = vpop.f32.mrf.mxu0
    %v146 = vadd.f32 %v117, %v145
    %147 = vdwg.mxu0
    %v148 = vxor.u32 %v143, 2147483648
    %v149 = vxor.u32 %v146, 2147483648
    %v150 = vmul.f32 %v148, 1.442695
    %v151 = vpow.pop %v150
    %v152 = vmul.f32 %v149, 1.442695
    %v153 = vpow.pop %v152
    %v154 = vadd.f32 %v151, 1.0
    %v155 = vadd.f32 %v153, 1.0
    %v156 = vrcp.pop %v154
    %v157 = vmul.f32 %v154, %v156
    %v158 = vsub.f32 1.0, %v157
    %v159 = vmul.f32 %v156, %v158
    %v160 = vadd.f32 %v156, %v159
    %vm161 = vweird.f32 %v154
    %vm162 = vweird.f32 %v156
    %vm163 = vmor %vm161, %vm162
    %v164 = vsel %vm163, %v156, %v160
    %v165 = vand.u32 2147483647, %v154
    %vm166 = vcmp.eq.f32.partialorder %v165, 8.507059e+37
    %v167 = vand.u32 %v154, 2147483648
    %v168 = vor.u32 1.1754944e-38, %v167
    %v169 = vsel %vm166, %v168, %v164
    %v170 = vmul.f32 1.0, %v169
    %v171 = vrcp.pop %v155
    %v172 = vmul.f32 %v155, %v171
    %v173 = vsub.f32 1.0, %v172
    %v174 = vmul.f32 %v171, %v173
    %v175 = vadd.f32 %v171, %v174
    %vm176 = vweird.f32 %v155
    %vm177 = vweird.f32 %v171
    %vm178 = vmor %vm176, %vm177
    %v179 = vsel %vm178, %v171, %v175
    %v180 = vand.u32 2147483647, %v155
    %vm181 = vcmp.eq.f32.partialorder %v180, 8.507059e+37
    %v182 = vand.u32 %v155, 2147483648
    %v183 = vor.u32 1.1754944e-38, %v182
    %v184 = vsel %vm181, %v183, %v179
    %v185 = vmul.f32 1.0, %v184
    %188 = vrot.lane.b32.xlu0 %v170, 32
    %v189 = vpop.permute.xlu0 %188
    %190 = vrot.lane.b32.xlu0 %v185, 32
    %v191 = vpop.permute.xlu0 %190
    %194 = vrot.lane.b32.xlu0 %v36, 41
    %v195 = vpop.permute.xlu0 %194
    %196 = vrot.lane.b32.xlu0 %v37, 41
    %v197 = vpop.permute.xlu0 %196
    %200 = vrot.lane.b32.xlu0 %v170, 33
    %v201 = vpop.permute.xlu0 %200
    %202 = vrot.lane.b32.xlu0 %v185, 33
    %v203 = vpop.permute.xlu0 %202
    %v206 = vsel %vm46, %v76, %v189
    %v207 = vsel %vm46, %v77, %v191
    %vm208 = vcmask 334848
    %v209 = vsel %vm208, %v206, %v195
    %v210 = vsel %vm208, %v207, %v197
    %vm211 = vcmask 343040
    %v212 = vsel %vm211, %v209, %v201
    %v213 = vsel %vm211, %v210, %v203
    %vm214 = vcmask 408576
    %v215 = vsel %vm214, %v212, 0.0
    %v216 = vsel %vm214, %v213, 0.0
    %217 = vst [vmem:[#allocation5] sm:$0xff] %v215
    %218 = vst [vmem:[#allocation5 + $0x8] sm:$0xff] %v216
    // Predicated region
    $region22: #{tpu_custom_call.1} parent=1 // pred_check
      _
    $region23: #{tpu_custom_call.1} parent=1 // pred_check_branch
      %220 = sbr.rel (0) target = $region25
    $region24: #{tpu_custom_call.1} parent=1 // pred_region
      %222 = vsyncadd [#allocation4], 0
      %s223 = sshll.u32 [#allocation5], 4
      %s224 = int_to_ptr.vmem [resolvable:$true] %s223
      %s225 = sshll.u32 %s4, 4
      %s226 = int_to_ptr.hbm [resolvable:$true] %s225
      %231 = dma.vmem_to_hbm [thread:$0]  %s224, 256, %s226, [#allocation4], 128, 128, 8
    $region25: #{tpu_custom_call.1} parent=1 // pred_fallthru
      _
    // Predicated region
    $region26: #{tpu_custom_call.1} parent=1 // pred_check
      _
    $region27: #{tpu_custom_call.1} parent=1 // pred_check_branch
      %233 = sbr.rel (0) target = $region29
    $region28: #{tpu_custom_call.1} parent=1 // pred_region
      %235 = dma.done [#allocation4], 256
    $region29: #{tpu_custom_call.1} parent=1 // pred_fallthru
      _
    %236 = vsyncpa [#allocation3], 1
    %237 = vsyncpa [#allocation4], 1

</llo_original>
